<compile_context>
chip_gen: v7x
topology: tpu7x:2x2x1
jax: 0.10.0
libtpu: 0.0.40
codegen_flags: <defaults>
</compile_context>

<pallas_src>
import functools

import jax
import jax.numpy as jnp
from jax.experimental import pallas as pl
from jax.experimental.pallas import tpu as pltpu


# ----------------------------------------------------------------------------
# Helpers
# ----------------------------------------------------------------------------
def _batch_block(batch):
    """Row-block over the batch: a multiple of 8 (sublane tile) dividing
    `batch`, capped so per-block tiles stay modest and (when possible) the
    grid has >= 2 programs for v7x's two TensorCores.  Falls back to the
    whole batch (single block) when batch is not 8-aligned (e.g. the demo)."""
    if batch % 8 != 0:
        return batch
    rb = 8
    while rb * 2 <= min(batch // 2, 64) and batch % (rb * 2) == 0:
        rb *= 2
    return rb


def _lookup_rows(tok_col, table3):
    """Gather rows of the fused (emb @ W.T + b) table via a one-hot matmul.

    tok_col : (rows, 1) int32 token ids
    table3  : (3, Vp, H) bf16 -- 3-way bf16 split of the f32 fused table
    returns : (rows, H) f32   -- ~f32-exact reconstruction (3x8 mantissa bits)
    """
    rows = tok_col.shape[0]
    vocab = table3.shape[1]
    lane_ids = jax.lax.broadcasted_iota(jnp.int32, (rows, vocab), 1)
    # 0/1 values are exactly representable in bf16 -> one MXU pass per split.
    oh = jnp.where(tok_col == lane_ids, 1.0, 0.0).astype(jnp.bfloat16)
    acc = jnp.dot(oh, table3[0], preferred_element_type=jnp.float32)
    acc = acc + jnp.dot(oh, table3[1], preferred_element_type=jnp.float32)
    acc = acc + jnp.dot(oh, table3[2], preferred_element_type=jnp.float32)
    return acc


# ----------------------------------------------------------------------------
# Kernel 1: triplet forward -> per-sample diff (one batch block per program)
# ----------------------------------------------------------------------------
def _triplet_kernel(tok_ref, tab_ref, diff_ref, *, rb, seq_len, hidden):
    # Token rows in this block are ordered (branch, batch_local, position).
    x = _lookup_rows(tok_ref[...], tab_ref[...])              # (3*rb*L, H)
    x = x.reshape(3, rb, seq_len, hidden)                     # free when L % 8 == 0
    pooled = jnp.max(x, axis=2)                               # (3, rb, H) max_pool1d

    # torch.nn.functional.normalize: v / max(||v||, 1e-12)
    #   == v * rsqrt(max(||v||^2, 1e-24))   (rsqrt runs on the EUP)
    sq = jnp.sum(pooled * pooled, axis=-1, keepdims=True)
    unit = pooled * jax.lax.rsqrt(jnp.maximum(sq, 1e-24))

    va, vp, vn = unit[0], unit[1], unit[2]                    # leading-dim slices (no relayout)
    ap = 1.0 - jnp.sum(va * vp, axis=-1, keepdims=True)       # (rb, 1)
    an = 1.0 - jnp.sum(va * vn, axis=-1, keepdims=True)       # (rb, 1)
    diff_ref[...] = ap - an + 0.1                             # margin = 0.1


# ----------------------------------------------------------------------------
# Kernel 2: encoder-only forward (SiameseNetwork.forward(a) path)
# ----------------------------------------------------------------------------
def _encode_kernel(tok_ref, tab_ref, vec_ref, *, rb, seq_len, hidden):
    x = _lookup_rows(tok_ref[...], tab_ref[...])              # (rb*L, H)
    x = x.reshape(rb, seq_len, hidden)
    vec_ref[...] = jnp.max(x, axis=1)                         # (rb, H)


# ----------------------------------------------------------------------------
# Parameters (PyTorch-equivalent layout/init)
# ----------------------------------------------------------------------------
def init_params(key, vocab_size, hidden_size):
    k_emb, k_w, k_b = jax.random.split(key, 3)
    emb = jax.random.normal(k_emb, (vocab_size + 1, hidden_size), jnp.float32)
    emb = emb.at[0].set(0.0)                       # nn.Embedding(padding_idx=0)
    bound = 1.0 / jnp.sqrt(hidden_size)
    w = jax.random.uniform(k_w, (hidden_size, hidden_size), jnp.float32,
                           -bound, bound)          # PyTorch (out, in) layout
    b = jax.random.uniform(k_b, (1, hidden_size), jnp.float32, -bound, bound)
    return {"embedding": emb, "w": w, "b": b}


def _fused_table(params):
    """fused[t] = linear(embedding[t]) = emb[t] @ W.T + b, padded to a vocab
    multiple of 128 and split into 3 bf16 components for the kernel."""
    emb, w, b = params["embedding"], params["w"], params["b"]
    fused = jax.lax.dot_general(
        emb, w, (((1,), (1,)), ((), ())),
        preferred_element_type=jnp.float32,
        precision=jax.lax.Precision.HIGHEST) + b                   # (V, H)
    v = fused.shape[0]
    fused = jnp.pad(fused, ((0, (-v) % 128), (0, 0)))              # padded rows never selected
    t0 = fused.astype(jnp.bfloat16)
    r1 = fused - t0.astype(jnp.float32)
    t1 = r1.astype(jnp.bfloat16)
    t2 = (r1 - t1.astype(jnp.float32)).astype(jnp.bfloat16)
    return jnp.stack([t0, t1, t2], axis=0)                         # (3, Vp, H) bf16


# ----------------------------------------------------------------------------
# Forward wrappers (one pallas_call per forward)
# ----------------------------------------------------------------------------
@jax.jit
def siamese_forward_triplet(params, a_tok, p_tok, n_tok):
    table = _fused_table(params)
    _, vp_, hidden = table.shape
    batch, seq = a_tok.shape
    rb = _batch_block(batch)
    nb = batch // rb
    rows_blk = 3 * rb * seq

    # Pack tokens as a column ordered (block, branch, batch_local, position) so
    # each batch block sees its three branches as contiguous, branch-major rows.
    toks = jnp.stack([a_tok, p_tok, n_tok], axis=0).astype(jnp.int32)   # (3, B, L)
    toks = toks.reshape(3, nb, rb, seq).transpose(1, 0, 2, 3)
    toks = toks.reshape(nb * rows_blk, 1)

    kernel = functools.partial(_triplet_kernel, rb=rb, seq_len=seq, hidden=hidden)
    cost = pl.CostEstimate(
        flops=2 * 3 * nb * rows_blk * vp_ * hidden,
        transcendentals=3 * batch,
        bytes_accessed=toks.size * 4 + table.size * 2 + batch * 4)

    diff = pl.pallas_call(
        kernel,
        grid=(nb,),
        out_shape=jax.ShapeDtypeStruct((batch, 1), jnp.float32),
        in_specs=[
            pl.BlockSpec((rows_blk, 1), lambda i: (i, 0)),
            pl.BlockSpec((3, vp_, hidden), lambda i: (0, 0, 0)),
        ],
        out_specs=pl.BlockSpec((rb, 1), lambda i: (i, 0)),
        compiler_params=pltpu.CompilerParams(
            dimension_semantics=("parallel",)),
        cost_estimate=cost,
    )(toks, table)

    # torch.mean(diff[diff > 0]): mean over POSITIVE entries only.
    # 0/0 -> NaN on an empty selection, matching torch.mean of an empty tensor.
    d = diff[:, 0]
    pos = d > 0.0
    num = jnp.sum(jnp.where(pos, d, 0.0))
    den = jnp.sum(pos.astype(jnp.float32))
    return num / den


@jax.jit
def siamese_forward_encode_only(params, a_tok):
    table = _fused_table(params)
    _, vp_, hidden = table.shape
    batch, seq = a_tok.shape
    rb = _batch_block(batch)
    nb = batch // rb
    rows_blk = rb * seq

    toks = a_tok.astype(jnp.int32).reshape(batch * seq, 1)

    kernel = functools.partial(_encode_kernel, rb=rb, seq_len=seq, hidden=hidden)
    cost = pl.CostEstimate(
        flops=2 * 3 * batch * seq * vp_ * hidden,
        transcendentals=0,
        bytes_accessed=toks.size * 4 + table.size * 2 + batch * hidden * 4)

    return pl.pallas_call(
        kernel,
        grid=(nb,),
        out_shape=jax.ShapeDtypeStruct((batch, hidden), jnp.float32),
        in_specs=[
            pl.BlockSpec((rows_blk, 1), lambda i: (i, 0)),
            pl.BlockSpec((3, vp_, hidden), lambda i: (0, 0, 0)),
        ],
        out_specs=pl.BlockSpec((rb, hidden), lambda i: (i, 0)),
        compiler_params=pltpu.CompilerParams(
            dimension_semantics=("parallel",)),
        cost_estimate=cost,
    )(toks, table)


if __name__ == "__main__":
    # config: vocab_size=30, hidden_size=32, max_length=8; batch=4
    VOCAB, HIDDEN, MAXLEN, BATCH = 30, 32, 8, 4

    key = jax.random.PRNGKey(0)
    k_params, k_a, k_p, k_n = jax.random.split(key, 4)
    params = init_params(k_params, VOCAB, HIDDEN)

    a_tok = jax.random.randint(k_a, (BATCH, MAXLEN), 0, VOCAB + 1, jnp.int32)
    p_tok = jax.random.randint(k_p, (BATCH, MAXLEN), 0, VOCAB + 1, jnp.int32)
    n_tok = jax.random.randint(k_n, (BATCH, MAXLEN), 0, VOCAB + 1, jnp.int32)

    # triplet path (forward with a, p, n)
    loss = jax.block_until_ready(
        siamese_forward_triplet(params, a_tok, p_tok, n_tok))

    # encoder-only path (forward with just a)
    vec = jax.block_until_ready(siamese_forward_encode_only(params, a_tok))

    assert loss.shape == ()
    assert vec.shape == (BATCH, HIDDEN)
    print("KERNEL_OK")
</pallas_src>

<mosaic_0001>
module attributes {stable_mosaic.version = 11 : i64} {
  func.func @_triplet_kernel(%arg0: i32, %arg1: memref<96x1xi32, #tpu.memory_space<vmem>>, %arg2: memref<3x128x32xbf16, #tpu.memory_space<vmem>>, %arg3: memref<4x1xf32, #tpu.memory_space<vmem>>) attributes {dimension_semantics = [#tpu.dimension_semantics<parallel>], iteration_bounds = array<i64: 1>, scalar_prefetch = 0 : i64, scratch_operands = 0 : i64, tpu.core_type = #tpu.core_type<tc>, window_params = [{transform_indices = @transform_0, window_bounds = array<i64: 96, 1>}, {pipeline_mode = #tpu.pipeline_mode<synchronous>, transform_indices = @transform_1, window_bounds = array<i64: 3, 128, 32>}, {transform_indices = @transform_2, window_bounds = array<i64: 4, 1>}]} {
    %c0 = arith.constant 0 : index
    %c0_0 = arith.constant 0 : index
    %0 = vector.load %arg1[%c0, %c0_0] : memref<96x1xi32, #tpu.memory_space<vmem>>, vector<96x1xi32>
    %c0_1 = arith.constant 0 : index
    %c0_2 = arith.constant 0 : index
    %c0_3 = arith.constant 0 : index
    %1 = vector.load %arg2[%c0_1, %c0_2, %c0_3] : memref<3x128x32xbf16, #tpu.memory_space<vmem>>, vector<3x128x32xbf16>
    %2 = tpu.iota {dimensions = array<i32: 1>} : vector<96x128xi32>
    %3 = vector.broadcast %0 : vector<96x1xi32> to vector<96x128xi32>
    %4 = arith.cmpi eq, %3, %2 : vector<96x128xi32>
    %cst = arith.constant 1.000000e+00 : f32
    %cst_4 = arith.constant 0.000000e+00 : f32
    %5 = vector.broadcast %cst : f32 to vector<96x128xf32>
    %6 = vector.broadcast %cst_4 : f32 to vector<96x128xf32>
    %7 = arith.select %4, %5, %6 : vector<96x128xi1>, vector<96x128xf32>
    %8 = arith.truncf %7 : vector<96x128xf32> to vector<96x128xbf16>
    %9 = vector.extract_strided_slice %1 {offsets = [0, 0, 0], sizes = [1, 128, 32], strides = [1, 1, 1]} : vector<3x128x32xbf16> to vector<1x128x32xbf16>
    %10 = vector.shape_cast %9 : vector<1x128x32xbf16> to vector<128x32xbf16>
    %cst_5 = arith.constant dense<0.000000e+00> : vector<96x32xf32>
    %11 = tpu.matmul %8, %10, %cst_5 {dimension_numbers = #tpu.dot_dimension_numbers<[1], [0], [0], [1], [0, 0, 1, 1], [], []>} : vector<96x128xbf16>, vector<128x32xbf16>, vector<96x32xf32> -> vector<96x32xf32>
    %12 = vector.extract_strided_slice %1 {offsets = [1, 0, 0], sizes = [1, 128, 32], strides = [1, 1, 1]} : vector<3x128x32xbf16> to vector<1x128x32xbf16>
    %13 = vector.shape_cast %12 : vector<1x128x32xbf16> to vector<128x32xbf16>
    %cst_6 = arith.constant dense<0.000000e+00> : vector<96x32xf32>
    %14 = tpu.matmul %8, %13, %cst_6 {dimension_numbers = #tpu.dot_dimension_numbers<[1], [0], [0], [1], [0, 0, 1, 1], [], []>} : vector<96x128xbf16>, vector<128x32xbf16>, vector<96x32xf32> -> vector<96x32xf32>
    %15 = arith.addf %11, %14 : vector<96x32xf32>
    %16 = vector.extract_strided_slice %1 {offsets = [2, 0, 0], sizes = [1, 128, 32], strides = [1, 1, 1]} : vector<3x128x32xbf16> to vector<1x128x32xbf16>
    %17 = vector.shape_cast %16 : vector<1x128x32xbf16> to vector<128x32xbf16>
    %cst_7 = arith.constant dense<0.000000e+00> : vector<96x32xf32>
    %18 = tpu.matmul %8, %17, %cst_7 {dimension_numbers = #tpu.dot_dimension_numbers<[1], [0], [0], [1], [0, 0, 1, 1], [], []>} : vector<96x128xbf16>, vector<128x32xbf16>, vector<96x32xf32> -> vector<96x32xf32>
    %19 = arith.addf %15, %18 : vector<96x32xf32>
    %20 = vector.shape_cast %19 : vector<96x32xf32> to vector<3x4x8x32xf32>
    %cst_8 = arith.constant dense<0xFF800000> : vector<3x4x32xf32>
    %21 = vector.multi_reduction <maximumf>, %20, %cst_8 [2] : vector<3x4x8x32xf32> to vector<3x4x32xf32>
    %22 = arith.mulf %21, %21 : vector<3x4x32xf32>
    %cst_9 = arith.constant dense<0.000000e+00> : vector<3x4xf32>
    %23 = vector.multi_reduction <add>, %22, %cst_9 [2] : vector<3x4x32xf32> to vector<3x4xf32>
    %24 = vector.shape_cast %23 : vector<3x4xf32> to vector<3x4x1xf32>
    %cst_10 = arith.constant 1.000000e-24 : f32
    %25 = vector.broadcast %cst_10 : f32 to vector<3x4x1xf32>
    %26 = arith.maximumf %24, %25 : vector<3x4x1xf32>
    %27 = math.rsqrt %26 : vector<3x4x1xf32>
    %28 = vector.broadcast %27 : vector<3x4x1xf32> to vector<3x4x32xf32>
    %29 = arith.mulf %21, %28 : vector<3x4x32xf32>
    %30 = vector.extract_strided_slice %29 {offsets = [0, 0, 0], sizes = [1, 4, 32], strides = [1, 1, 1]} : vector<3x4x32xf32> to vector<1x4x32xf32>
    %31 = vector.shape_cast %30 : vector<1x4x32xf32> to vector<4x32xf32>
    %32 = vector.extract_strided_slice %29 {offsets = [1, 0, 0], sizes = [1, 4, 32], strides = [1, 1, 1]} : vector<3x4x32xf32> to vector<1x4x32xf32>
    %33 = vector.shape_cast %32 : vector<1x4x32xf32> to vector<4x32xf32>
    %34 = vector.extract_strided_slice %29 {offsets = [2, 0, 0], sizes = [1, 4, 32], strides = [1, 1, 1]} : vector<3x4x32xf32> to vector<1x4x32xf32>
    %35 = vector.shape_cast %34 : vector<1x4x32xf32> to vector<4x32xf32>
    %36 = arith.mulf %31, %33 : vector<4x32xf32>
    %cst_11 = arith.constant dense<0.000000e+00> : vector<4xf32>
    %37 = vector.multi_reduction <add>, %36, %cst_11 [1] : vector<4x32xf32> to vector<4xf32>
    %38 = vector.shape_cast %37 : vector<4xf32> to vector<4x1xf32>
    %cst_12 = arith.constant 1.000000e+00 : f32
    %39 = vector.broadcast %cst_12 : f32 to vector<4x1xf32>
    %40 = arith.subf %39, %38 : vector<4x1xf32>
    %41 = arith.mulf %31, %35 : vector<4x32xf32>
    %cst_13 = arith.constant dense<0.000000e+00> : vector<4xf32>
    %42 = vector.multi_reduction <add>, %41, %cst_13 [1] : vector<4x32xf32> to vector<4xf32>
    %43 = vector.shape_cast %42 : vector<4xf32> to vector<4x1xf32>
    %cst_14 = arith.constant 1.000000e+00 : f32
    %44 = vector.broadcast %cst_14 : f32 to vector<4x1xf32>
    %45 = arith.subf %44, %43 : vector<4x1xf32>
    %46 = arith.subf %40, %45 : vector<4x1xf32>
    %cst_15 = arith.constant 1.000000e-01 : f32
    %47 = vector.broadcast %cst_15 : f32 to vector<4x1xf32>
    %48 = arith.addf %46, %47 : vector<4x1xf32>
    %c0_16 = arith.constant 0 : index
    %c0_17 = arith.constant 0 : index
    %49 = vector.load %arg3[%c0_16, %c0_17] : memref<4x1xf32, #tpu.memory_space<vmem>>, vector<4x1xf32>
    tpu.vector_store %arg3[%c0_16, %c0_17], %48 {strides = array<i32>} : memref<4x1xf32, #tpu.memory_space<vmem>>, vector<4x1xf32>,
    return
  }
  func.func @transform_0(%arg0: i32) -> (i32, i32) {
    %c0_i32 = arith.constant 0 : i32
    %c0_i32_0 = arith.constant 0 : i32
    return %arg0, %c0_i32 : i32, i32
  }
  func.func @transform_1(%arg0: i32) -> (i32, i32, i32) {
    %c0_i32 = arith.constant 0 : i32
    %c0_i32_0 = arith.constant 0 : i32
    %c0_i32_1 = arith.constant 0 : i32
    %c0_i32_2 = arith.constant 0 : i32
    return %c0_i32, %c0_i32_0, %c0_i32_1 : i32, i32, i32
  }
  func.func @transform_2(%arg0: i32) -> (i32, i32) {
    %c0_i32 = arith.constant 0 : i32
    %c0_i32_0 = arith.constant 0 : i32
    return %arg0, %c0_i32 : i32, i32
  }
}

</mosaic_0001>

<llo_original>
// kernel: siamese_forward_triplet.1
$region0: #{siamese_forward_triplet.1}
  #allocation0 [shape = 'u32[]', space=smem, size = 0x4, offset = 0x4, fixed_abs, tag = 'smem constant byte address 0x4 - core index']
  #allocation1 [shape = 'u32[144,128]{1,0:T(1,128)}', space=vmem, size = 0x12000, scoped, tag = 'internal scratch']
  %s0 = inlined_call_operand.vmem [shape: s32[96,1], index: 0, kind: input, shape index: {}]
  %s1 = inlined_call_operand.vmem [shape: bf16[3,128,32], index: 1, kind: input, shape index: {}]
  %s2 = inlined_call_operand.vmem [shape: f32[4,1], index: 2, kind: output, shape index: {}]
  %s3 = sld [smem:[#allocation0]]
  $region18: #{siamese_forward_triplet.1} parent=0
    _
  %s5 = ssub.s32 1, %s3
  %s6 = scalar_select 0, %s5, %s3
  // Predicated region
  $region2: #{siamese_forward_triplet.1} parent=0 // pred_check
    _
  $region3: #{siamese_forward_triplet.1} parent=0 // pred_check_branch
    %8 = sbr.rel (0) target = $region5
  $region4: #{siamese_forward_triplet.1} parent=0 // pred_region
    _
  $region5: #{siamese_forward_triplet.1} parent=0 // pred_fallthru
    _
  // Predicated region
  $region6: #{siamese_forward_triplet.1} parent=0 // pred_check
    _
  $region7: #{siamese_forward_triplet.1} parent=0 // pred_check_branch
    %10 = sbr.rel (0) target = $region9
  $region8: #{siamese_forward_triplet.1} parent=0 // pred_region
    _
  $region9: #{siamese_forward_triplet.1} parent=0 // pred_fallthru
    _
  %v12 = vld [vmem:[%s0] sm:$0xff]
  %v13 = vld [vmem:[%s0 + $0x8] sm:$0xff]
  %v14 = vld [vmem:[%s0 + $0x10] sm:$0xff]
  %v15 = vld [vmem:[%s0 + $0x18] sm:$0xff]
  %v16 = vld [vmem:[%s0 + $0x20] sm:$0xff]
  %v17 = vld [vmem:[%s0 + $0x28] sm:$0xff]
  %v18 = vld [vmem:[%s0 + $0x30] sm:$0xff]
  %v19 = vld [vmem:[%s0 + $0x38] sm:$0xff]
  %v20 = vld [vmem:[%s0 + $0x40] sm:$0xff]
  %v21 = vld [vmem:[%s0 + $0x48] sm:$0xff]
  %v22 = vld [vmem:[%s0 + $0x50] sm:$0xff]
  %v23 = vld [vmem:[%s0 + $0x58] sm:$0xff]
  %v24 = vld [vmem:[%s1] sm:$0xf]
  %v25 = vld [vmem:[%s1 + $0x4] sm:$0xf]
  %v26 = vld [vmem:[%s1 + $0x8] sm:$0xf]
  %v27 = vld [vmem:[%s1 + $0xc] sm:$0xf]
  %v28 = vld [vmem:[%s1 + $0x10] sm:$0xf]
  %v29 = vld [vmem:[%s1 + $0x14] sm:$0xf]
  %v30 = vld [vmem:[%s1 + $0x18] sm:$0xf]
  %v31 = vld [vmem:[%s1 + $0x1c] sm:$0xf]
  %v32 = vld [vmem:[%s1 + $0x20] sm:$0xf]
  %v33 = vld [vmem:[%s1 + $0x24] sm:$0xf]
  %v34 = vld [vmem:[%s1 + $0x28] sm:$0xf]
  %v35 = vld [vmem:[%s1 + $0x2c] sm:$0xf]
  %v36 = vld [vmem:[%s1 + $0x30] sm:$0xf]
  %v37 = vld [vmem:[%s1 + $0x34] sm:$0xf]
  %v38 = vld [vmem:[%s1 + $0x38] sm:$0xf]
  %v39 = vld [vmem:[%s1 + $0x3c] sm:$0xf]
  %v40 = vld [vmem:[%s1 + $0x40] sm:$0xf]
  %v41 = vld [vmem:[%s1 + $0x44] sm:$0xf]
  %v42 = vld [vmem:[%s1 + $0x48] sm:$0xf]
  %v43 = vld [vmem:[%s1 + $0x4c] sm:$0xf]
  %v44 = vld [vmem:[%s1 + $0x50] sm:$0xf]
  %v45 = vld [vmem:[%s1 + $0x54] sm:$0xf]
  %v46 = vld [vmem:[%s1 + $0x58] sm:$0xf]
  %v47 = vld [vmem:[%s1 + $0x5c] sm:$0xf]
  %v48 = vld [vmem:[%s1 + $0x60] sm:$0xf]
  %v49 = vld [vmem:[%s1 + $0x64] sm:$0xf]
  %v50 = vld [vmem:[%s1 + $0x68] sm:$0xf]
  %v51 = vld [vmem:[%s1 + $0x6c] sm:$0xf]
  %v52 = vld [vmem:[%s1 + $0x70] sm:$0xf]
  %v53 = vld [vmem:[%s1 + $0x74] sm:$0xf]
  %v54 = vld [vmem:[%s1 + $0x78] sm:$0xf]
  %v55 = vld [vmem:[%s1 + $0x7c] sm:$0xf]
  %v56 = vld [vmem:[%s1 + $0x80] sm:$0xf]
  %v57 = vld [vmem:[%s1 + $0x84] sm:$0xf]
  %v58 = vld [vmem:[%s1 + $0x88] sm:$0xf]
  %v59 = vld [vmem:[%s1 + $0x8c] sm:$0xf]
  %v60 = vld [vmem:[%s1 + $0x90] sm:$0xf]
  %v61 = vld [vmem:[%s1 + $0x94] sm:$0xf]
  %v62 = vld [vmem:[%s1 + $0x98] sm:$0xf]
  %v63 = vld [vmem:[%s1 + $0x9c] sm:$0xf]
  %v64 = vld [vmem:[%s1 + $0xa0] sm:$0xf]
  %v65 = vld [vmem:[%s1 + $0xa4] sm:$0xf]
  %v66 = vld [vmem:[%s1 + $0xa8] sm:$0xf]
  %v67 = vld [vmem:[%s1 + $0xac] sm:$0xf]
  %v68 = vld [vmem:[%s1 + $0xb0] sm:$0xf]
  %v69 = vld [vmem:[%s1 + $0xb4] sm:$0xf]
  %v70 = vld [vmem:[%s1 + $0xb8] sm:$0xf]
  %v71 = vld [vmem:[%s1 + $0xbc] sm:$0xf]
  %v72 = vlaneseq
  %v73 = vand.u32 %v72, 127
  %74 = vset.pattern.permute.xlu0 0
  %75 = vperm.xlu0 %74, %v12
  %v76 = vpop.permute.xlu0 %75
  %77 = vset.pattern.permute.xlu0 0
  %78 = vperm.xlu0 %77, %v13
  %v79 = vpop.permute.xlu0 %78
  %80 = vset.pattern.permute.xlu0 0
  %81 = vperm.xlu0 %80, %v14
  %v82 = vpop.permute.xlu0 %81
  %83 = vset.pattern.permute.xlu0 0
  %84 = vperm.xlu0 %83, %v15
  %v85 = vpop.permute.xlu0 %84
  %86 = vset.pattern.permute.xlu0 0
  %87 = vperm.xlu0 %86, %v16
  %v88 = vpop.permute.xlu0 %87
  %89 = vset.pattern.permute.xlu0 0
  %90 = vperm.xlu0 %89, %v17
  %v91 = vpop.permute.xlu0 %90
  %92 = vset.pattern.permute.xlu0 0
  %93 = vperm.xlu0 %92, %v18
  %v94 = vpop.permute.xlu0 %93
  %95 = vset.pattern.permute.xlu0 0
  %96 = vperm.xlu0 %95, %v19
  %v97 = vpop.permute.xlu0 %96
  %98 = vset.pattern.permute.xlu0 0
  %99 = vperm.xlu0 %98, %v20
  %v100 = vpop.permute.xlu0 %99
  %101 = vset.pattern.permute.xlu0 0
  %102 = vperm.xlu0 %101, %v21
  %v103 = vpop.permute.xlu0 %102
  %104 = vset.pattern.permute.xlu0 0
  %105 = vperm.xlu0 %104, %v22
  %v106 = vpop.permute.xlu0 %105
  %107 = vset.pattern.permute.xlu0 0
  %108 = vperm.xlu0 %107, %v23
  %v109 = vpop.permute.xlu0 %108
  %vm110 = vcmp.eq.s32.totalorder %v76, %v73
  %vm111 = vcmp.eq.s32.totalorder %v79, %v73
  %vm112 = vcmp.eq.s32.totalorder %v82, %v73
  %vm113 = vcmp.eq.s32.totalorder %v85, %v73
  %vm114 = vcmp.eq.s32.totalorder %v88, %v73
  %vm115 = vcmp.eq.s32.totalorder %v91, %v73
  %vm116 = vcmp.eq.s32.totalorder %v94, %v73
  %vm117 = vcmp.eq.s32.totalorder %v97, %v73
  %vm118 = vcmp.eq.s32.totalorder %v100, %v73
  %vm119 = vcmp.eq.s32.totalorder %v103, %v73
  %vm120 = vcmp.eq.s32.totalorder %v106, %v73
  %vm121 = vcmp.eq.s32.totalorder %v109, %v73
  %v122 = vsel %vm110, 1.0, 0.0
  %v123 = vsel %vm111, 1.0, 0.0
  %v124 = vsel %vm112, 1.0, 0.0
  %v125 = vsel %vm113, 1.0, 0.0
  %v126 = vsel %vm114, 1.0, 0.0
  %v127 = vsel %vm115, 1.0, 0.0
  %v128 = vsel %vm116, 1.0, 0.0
  %v129 = vsel %vm117, 1.0, 0.0
  %v130 = vsel %vm118, 1.0, 0.0
  %v131 = vsel %vm119, 1.0, 0.0
  %v132 = vsel %vm120, 1.0, 0.0
  %v133 = vsel %vm121, 1.0, 0.0
  %v134 = vpack.c.bf16 %v123, %v122
  %v135 = vpack.c.bf16 %v125, %v124
  %v136 = vpack.c.bf16 %v127, %v126
  %v137 = vpack.c.bf16 %v129, %v128
  %v138 = vpack.c.bf16 %v131, %v130
  %v139 = vpack.c.bf16 %v133, %v132
  %v156 = vunpack.c.l.b16 %v40
  %v157 = vunpack.c.l.b16 %v41
  %v158 = vunpack.c.l.b16 %v42
  %v159 = vunpack.c.l.b16 %v43
  %v160 = vunpack.c.l.b16 %v44
  %v161 = vunpack.c.l.b16 %v45
  %v162 = vunpack.c.l.b16 %v46
  %v163 = vunpack.c.l.b16 %v47
  %v164 = vunpack.c.l.b16 %v48
  %v165 = vunpack.c.l.b16 %v49
  %v166 = vunpack.c.l.b16 %v50
  %v167 = vunpack.c.l.b16 %v51
  %v168 = vunpack.c.l.b16 %v52
  %v169 = vunpack.c.l.b16 %v53
  %v170 = vunpack.c.l.b16 %v54
  %v171 = vunpack.c.l.b16 %v55
  %v172 = vpack.c.b16 %v157, %v156
  %v173 = vpack.c.b16 %v159, %v158
  %v174 = vpack.c.b16 %v161, %v160
  %v175 = vpack.c.b16 %v163, %v162
  %v176 = vpack.c.b16 %v165, %v164
  %v177 = vpack.c.b16 %v167, %v166
  %v178 = vpack.c.b16 %v169, %v168
  %v179 = vpack.c.b16 %v171, %v170
  %188 = vmatprep.subr.bf16.mxu0 0
  %189 = vmatpush1.bf16.msra.mxu0 %v172
  %190 = vmatprep.subr.bf16.mxu0 0
  %191 = vmatpush1.bf16.msra.mxu0 %v173
  %192 = vmatprep.subr.bf16.mxu0 0
  %193 = vmatpush1.bf16.msra.mxu0 %v174
  %194 = vmatprep.subr.bf16.mxu0 0
  %195 = vmatpush1.bf16.msra.mxu0 %v175
  %196 = vmatprep.subr.bf16.mxu0 0
  %197 = vmatpush1.bf16.msra.mxu0 %v176
  %198 = vmatprep.subr.bf16.mxu0 0
  %199 = vmatpush1.bf16.msra.mxu0 %v177
  %200 = vmatprep.subr.bf16.mxu0 0
  %201 = vmatpush1.bf16.msra.mxu0 %v178
  %202 = vmatprep.subr.bf16.mxu0 0
  %203 = vmatpush1.bf16.msra.mxu0 %v179
  %204 = vmatprep.subr.bf16.mxu0 0
  %205 = vmatpush1.bf16.msra.mxu0 0
  %206 = vmatprep.subr.bf16.mxu0 0
  %207 = vmatpush1.bf16.msra.mxu0 0
  %208 = vmatprep.subr.bf16.mxu0 0
  %209 = vmatpush1.bf16.msra.mxu0 0
  %210 = vmatprep.subr.bf16.mxu0 0
  %211 = vmatpush1.bf16.msra.mxu0 0
  %212 = vmatprep.subr.bf16.mxu0 0
  %213 = vmatpush1.bf16.msra.mxu0 0
  %214 = vmatprep.subr.bf16.mxu0 0
  %215 = vmatpush1.bf16.msra.mxu0 0
  %216 = vmatprep.subr.bf16.mxu0 0
  %217 = vmatpush1.bf16.msra.mxu0 0
  %218 = vmatprep.subr.bf16.mxu0 0
  %219 = vmatpush1.bf16.msra.mxu0 0
  %220 = vmatprep.mubr.bf16.mxu0 0
  %221 = vmatmul.mubr.bf16.gmra.mrb[0].mxu0 %v134
  %v222 = vpop.f32.mrb[0].mxu0
  %v223 = vadd.f32 0.0, %v222
  %v224 = vpop.f32.mrb[0].mxu0
  %v225 = vpop.f32.mrb[0].mxu0
  %v226 = vadd.f32 0.0, %v225
  %v227 = vpop.f32.mrb[0].mxu0
  %228 = vmatprep.mubr.bf16.mxu0 0
  %229 = vmatmul.mubr.bf16.gmra.mrb[0].mxu0 %v135
  %v230 = vpop.f32.mrb[0].mxu0
  %v231 = vadd.f32 0.0, %v230
  %v232 = vpop.f32.mrb[0].mxu0
  %v233 = vpop.f32.mrb[0].mxu0
  %v234 = vadd.f32 0.0, %v233
  %v235 = vpop.f32.mrb[0].mxu0
  %236 = vmatprep.mubr.bf16.mxu0 0
  %237 = vmatmul.mubr.bf16.gmra.mrb[0].mxu0 %v136
  %v238 = vpop.f32.mrb[0].mxu0
  %v239 = vadd.f32 0.0, %v238
  %v240 = vpop.f32.mrb[0].mxu0
  %v241 = vpop.f32.mrb[0].mxu0
  %v242 = vadd.f32 0.0, %v241
  %v243 = vpop.f32.mrb[0].mxu0
  %244 = vmatprep.mubr.bf16.mxu0 0
  %245 = vmatmul.mubr.bf16.gmra.mrb[0].mxu0 %v137
  %v246 = vpop.f32.mrb[0].mxu0
  %v247 = vadd.f32 0.0, %v246
  %v248 = vpop.f32.mrb[0].mxu0
  %v249 = vpop.f32.mrb[0].mxu0
  %v250 = vadd.f32 0.0, %v249
  %v251 = vpop.f32.mrb[0].mxu0
  %252 = vmatprep.mubr.bf16.mxu0 0
  %253 = vmatmul.mubr.bf16.gmra.mrb[0].mxu0 %v138
  %v254 = vpop.f32.mrb[0].mxu0
  %v255 = vadd.f32 0.0, %v254
  %v256 = vpop.f32.mrb[0].mxu0
  %v257 = vpop.f32.mrb[0].mxu0
  %v258 = vadd.f32 0.0, %v257
  %v259 = vpop.f32.mrb[0].mxu0
  %260 = vmatprep.mubr.bf16.mxu0 0
  %261 = vmatmul.mubr.bf16.gmra.mrb[0].mxu0 %v139
  %v262 = vpop.f32.mrb[0].mxu0
  %v263 = vadd.f32 0.0, %v262
  %v264 = vpop.f32.mrb[0].mxu0
  %v265 = vpop.f32.mrb[0].mxu0
  %v266 = vadd.f32 0.0, %v265
  %v267 = vpop.f32.mrb[0].mxu0
  %268 = vdwg.mxu0
  %v285 = vunpack.c.l.b16 %v24
  %v286 = vunpack.c.l.b16 %v25
  %v287 = vunpack.c.l.b16 %v26
  %v288 = vunpack.c.l.b16 %v27
  %v289 = vunpack.c.l.b16 %v28
  %v290 = vunpack.c.l.b16 %v29
  %v291 = vunpack.c.l.b16 %v30
  %v292 = vunpack.c.l.b16 %v31
  %v293 = vunpack.c.l.b16 %v32
  %v294 = vunpack.c.l.b16 %v33
  %v295 = vunpack.c.l.b16 %v34
  %v296 = vunpack.c.l.b16 %v35
  %v297 = vunpack.c.l.b16 %v36
  %v298 = vunpack.c.l.b16 %v37
  %v299 = vunpack.c.l.b16 %v38
  %v300 = vunpack.c.l.b16 %v39
  %v301 = vpack.c.b16 %v286, %v285
  %v302 = vpack.c.b16 %v288, %v287
  %v303 = vpack.c.b16 %v290, %v289
  %v304 = vpack.c.b16 %v292, %v291
  %v305 = vpack.c.b16 %v294, %v293
  %v306 = vpack.c.b16 %v296, %v295
  %v307 = vpack.c.b16 %v298, %v297
  %v308 = vpack.c.b16 %v300, %v299
  %317 = vmatprep.subr.bf16.mxu0 0
  %318 = vmatpush1.bf16.msra.mxu0 %v301
  %319 = vmatprep.subr.bf16.mxu0 0
  %320 = vmatpush1.bf16.msra.mxu0 %v302
  %321 = vmatprep.subr.bf16.mxu0 0
  %322 = vmatpush1.bf16.msra.mxu0 %v303
  %323 = vmatprep.subr.bf16.mxu0 0
  %324 = vmatpush1.bf16.msra.mxu0 %v304
  %325 = vmatprep.subr.bf16.mxu0 0
  %326 = vmatpush1.bf16.msra.mxu0 %v305
  %327 = vmatprep.subr.bf16.mxu0 0
  %328 = vmatpush1.bf16.msra.mxu0 %v306
  %329 = vmatprep.subr.bf16.mxu0 0
  %330 = vmatpush1.bf16.msra.mxu0 %v307
  %331 = vmatprep.subr.bf16.mxu0 0
  %332 = vmatpush1.bf16.msra.mxu0 %v308
  %333 = vmatprep.subr.bf16.mxu0 0
  %334 = vmatpush1.bf16.msra.mxu0 0
  %335 = vmatprep.subr.bf16.mxu0 0
  %336 = vmatpush1.bf16.msra.mxu0 0
  %337 = vmatprep.subr.bf16.mxu0 0
  %338 = vmatpush1.bf16.msra.mxu0 0
  %339 = vmatprep.subr.bf16.mxu0 0
  %340 = vmatpush1.bf16.msra.mxu0 0
  %341 = vmatprep.subr.bf16.mxu0 0
  %342 = vmatpush1.bf16.msra.mxu0 0
  %343 = vmatprep.subr.bf16.mxu0 0
  %344 = vmatpush1.bf16.msra.mxu0 0
  %345 = vmatprep.subr.bf16.mxu0 0
  %346 = vmatpush1.bf16.msra.mxu0 0
  %347 = vmatprep.subr.bf16.mxu0 0
  %348 = vmatpush1.bf16.msra.mxu0 0
  %349 = vmatprep.mubr.bf16.mxu0 0
  %350 = vmatmul.mubr.bf16.gmra.mrb[0].mxu0 %v134
  %v351 = vpop.f32.mrb[0].mxu0
  %v352 = vadd.f32 %v223, %v351
  %v353 = vpop.f32.mrb[0].mxu0
  %v354 = vpop.f32.mrb[0].mxu0
  %v355 = vadd.f32 %v226, %v354
  %v356 = vpop.f32.mrb[0].mxu0
  %357 = vmatprep.mubr.bf16.mxu0 0
  %358 = vmatmul.mubr.bf16.gmra.mrb[0].mxu0 %v135
  %v359 = vpop.f32.mrb[0].mxu0
  %v360 = vadd.f32 %v231, %v359
  %v361 = vpop.f32.mrb[0].mxu0
  %v362 = vpop.f32.mrb[0].mxu0
  %v363 = vadd.f32 %v234, %v362
  %v364 = vpop.f32.mrb[0].mxu0
  %365 = vmatprep.mubr.bf16.mxu0 0
  %366 = vmatmul.mubr.bf16.gmra.mrb[0].mxu0 %v136
  %v367 = vpop.f32.mrb[0].mxu0
  %v368 = vadd.f32 %v239, %v367
  %v369 = vpop.f32.mrb[0].mxu0
  %v370 = vpop.f32.mrb[0].mxu0
  %v371 = vadd.f32 %v242, %v370
  %v372 = vpop.f32.mrb[0].mxu0
  %373 = vmatprep.mubr.bf16.mxu0 0
  %374 = vmatmul.mubr.bf16.gmra.mrb[0].mxu0 %v137
  %v375 = vpop.f32.mrb[0].mxu0
  %v376 = vadd.f32 %v247, %v375
  %v377 = vpop.f32.mrb[0].mxu0
  %v378 = vpop.f32.mrb[0].mxu0
  %v379 = vadd.f32 %v250, %v378
  %v380 = vpop.f32.mrb[0].mxu0
  %381 = vmatprep.mubr.bf16.mxu0 0
  %382 = vmatmul.mubr.bf16.gmra.mrb[0].mxu0 %v138
  %v383 = vpop.f32.mrb[0].mxu0
  %v384 = vadd.f32 %v255, %v383
  %v385 = vpop.f32.mrb[0].mxu0
  %v386 = vpop.f32.mrb[0].mxu0
  %v387 = vadd.f32 %v258, %v386
  %v388 = vpop.f32.mrb[0].mxu0
  %389 = vmatprep.mubr.bf16.mxu0 0
  %390 = vmatmul.mubr.bf16.gmra.mrb[0].mxu0 %v139
  %v391 = vpop.f32.mrb[0].mxu0
  %v392 = vadd.f32 %v263, %v391
  %v393 = vpop.f32.mrb[0].mxu0
  %v394 = vpop.f32.mrb[0].mxu0
  %v395 = vadd.f32 %v266, %v394
  %v396 = vpop.f32.mrb[0].mxu0
  %397 = vdwg.mxu0
  %v414 = vunpack.c.l.b16 %v56
  %v415 = vunpack.c.l.b16 %v57
  %v416 = vunpack.c.l.b16 %v58
  %v417 = vunpack.c.l.b16 %v59
  %v418 = vunpack.c.l.b16 %v60
  %v419 = vunpack.c.l.b16 %v61
  %v420 = vunpack.c.l.b16 %v62
  %v421 = vunpack.c.l.b16 %v63
  %v422 = vunpack.c.l.b16 %v64
  %v423 = vunpack.c.l.b16 %v65
  %v424 = vunpack.c.l.b16 %v66
  %v425 = vunpack.c.l.b16 %v67
  %v426 = vunpack.c.l.b16 %v68
  %v427 = vunpack.c.l.b16 %v69
  %v428 = vunpack.c.l.b16 %v70
  %v429 = vunpack.c.l.b16 %v71
  %v430 = vpack.c.b16 %v415, %v414
  %v431 = vpack.c.b16 %v417, %v416
  %v432 = vpack.c.b16 %v419, %v418
  %v433 = vpack.c.b16 %v421, %v420
  %v434 = vpack.c.b16 %v423, %v422
  %v435 = vpack.c.b16 %v425, %v424
  %v436 = vpack.c.b16 %v427, %v426
  %v437 = vpack.c.b16 %v429, %v428
  %446 = vmatprep.subr.bf16.mxu0 0
  %447 = vmatpush1.bf16.msra.mxu0 %v430
  %448 = vmatprep.subr.bf16.mxu0 0
  %449 = vmatpush1.bf16.msra.mxu0 %v431
  %450 = vmatprep.subr.bf16.mxu0 0
  %451 = vmatpush1.bf16.msra.mxu0 %v432
  %452 = vmatprep.subr.bf16.mxu0 0
  %453 = vmatpush1.bf16.msra.mxu0 %v433
  %454 = vmatprep.subr.bf16.mxu0 0
  %455 = vmatpush1.bf16.msra.mxu0 %v434
  %456 = vmatprep.subr.bf16.mxu0 0
  %457 = vmatpush1.bf16.msra.mxu0 %v435
  %458 = vmatprep.subr.bf16.mxu0 0
  %459 = vmatpush1.bf16.msra.mxu0 %v436
  %460 = vmatprep.subr.bf16.mxu0 0
  %461 = vmatpush1.bf16.msra.mxu0 %v437
  %462 = vmatprep.subr.bf16.mxu0 0
  %463 = vmatpush1.bf16.msra.mxu0 0
  %464 = vmatprep.subr.bf16.mxu0 0
  %465 = vmatpush1.bf16.msra.mxu0 0
  %466 = vmatprep.subr.bf16.mxu0 0
  %467 = vmatpush1.bf16.msra.mxu0 0
  %468 = vmatprep.subr.bf16.mxu0 0
  %469 = vmatpush1.bf16.msra.mxu0 0
  %470 = vmatprep.subr.bf16.mxu0 0
  %471 = vmatpush1.bf16.msra.mxu0 0
  %472 = vmatprep.subr.bf16.mxu0 0
  %473 = vmatpush1.bf16.msra.mxu0 0
  %474 = vmatprep.subr.bf16.mxu0 0
  %475 = vmatpush1.bf16.msra.mxu0 0
  %476 = vmatprep.subr.bf16.mxu0 0
  %477 = vmatpush1.bf16.msra.mxu0 0
  %478 = vmatprep.mubr.bf16.mxu0 0
  %479 = vmatmul.mubr.bf16.gmra.mrb[0].mxu0 %v134
  %v480 = vpop.f32.mrb[0].mxu0
  %v481 = vadd.f32 0.0, %v480
  %v482 = vpop.f32.mrb[0].mxu0
  %v483 = vpop.f32.mrb[0].mxu0
  %v484 = vadd.f32 0.0, %v483
  %v485 = vpop.f32.mrb[0].mxu0
  %486 = vmatprep.mubr.bf16.mxu0 0
  %487 = vmatmul.mubr.bf16.gmra.mrb[0].mxu0 %v135
  %v488 = vpop.f32.mrb[0].mxu0
  %v489 = vadd.f32 0.0, %v488
  %v490 = vpop.f32.mrb[0].mxu0
  %v491 = vpop.f32.mrb[0].mxu0
  %v492 = vadd.f32 0.0, %v491
  %v493 = vpop.f32.mrb[0].mxu0
  %494 = vmatprep.mubr.bf16.mxu0 0
  %495 = vmatmul.mubr.bf16.gmra.mrb[0].mxu0 %v136
  %v496 = vpop.f32.mrb[0].mxu0
  %v497 = vadd.f32 0.0, %v496
  %v498 = vpop.f32.mrb[0].mxu0
  %v499 = vpop.f32.mrb[0].mxu0
  %v500 = vadd.f32 0.0, %v499
  %v501 = vpop.f32.mrb[0].mxu0
  %502 = vmatprep.mubr.bf16.mxu0 0
  %503 = vmatmul.mubr.bf16.gmra.mrb[0].mxu0 %v137
  %v504 = vpop.f32.mrb[0].mxu0
  %v505 = vadd.f32 0.0, %v504
  %v506 = vpop.f32.mrb[0].mxu0
  %v507 = vpop.f32.mrb[0].mxu0
  %v508 = vadd.f32 0.0, %v507
  %v509 = vpop.f32.mrb[0].mxu0
  %510 = vmatprep.mubr.bf16.mxu0 0
  %511 = vmatmul.mubr.bf16.gmra.mrb[0].mxu0 %v138
  %v512 = vpop.f32.mrb[0].mxu0
  %v513 = vadd.f32 0.0, %v512
  %v514 = vpop.f32.mrb[0].mxu0
  %v515 = vpop.f32.mrb[0].mxu0
  %v516 = vadd.f32 0.0, %v515
  %v517 = vpop.f32.mrb[0].mxu0
  %518 = vmatprep.mubr.bf16.mxu0 0
  %519 = vmatmul.mubr.bf16.gmra.mrb[0].mxu0 %v139
  %v520 = vpop.f32.mrb[0].mxu0
  %v521 = vadd.f32 0.0, %v520
  %v522 = vpop.f32.mrb[0].mxu0
  %v523 = vpop.f32.mrb[0].mxu0
  %v524 = vadd.f32 0.0, %v523
  %v525 = vpop.f32.mrb[0].mxu0
  %526 = vdwg.mxu0
  %v527 = vadd.f32 %v352, %v481
  %v528 = vadd.f32 %v355, %v484
  %v529 = vadd.f32 %v360, %v489
  %v530 = vadd.f32 %v363, %v492
  %v531 = vadd.f32 %v368, %v497
  %v532 = vadd.f32 %v371, %v500
  %v533 = vadd.f32 %v376, %v505
  %v534 = vadd.f32 %v379, %v508
  %v535 = vadd.f32 %v384, %v513
  %v536 = vadd.f32 %v387, %v516
  %v537 = vadd.f32 %v392, %v521
  %v538 = vadd.f32 %v395, %v524
  %vm539 = vcmask 261120
  %v540 = vsel %vm539, %v527, -inf
  %v541 = vrot.slane %v540, 4
  %v542 = vmax.f32 %v540, %v541
  %v543 = vrot.slane %v542, 2
  %v544 = vmax.f32 %v542, %v543
  %v545 = vrot.slane %v544, 1
  %v546 = vmax.f32 %v544, %v545
  %v547 = vsel %vm539, %v528, -inf
  %v548 = vrot.slane %v547, 4
  %v549 = vmax.f32 %v547, %v548
  %v550 = vrot.slane %v549, 2
  %v551 = vmax.f32 %v549, %v550
  %v552 = vrot.slane %v551, 1
  %v553 = vmax.f32 %v551, %v552
  %v554 = vsel %vm539, %v529, -inf
  %v555 = vrot.slane %v554, 4
  %v556 = vmax.f32 %v554, %v555
  %v557 = vrot.slane %v556, 2
  %v558 = vmax.f32 %v556, %v557
  %v559 = vrot.slane %v558, 1
  %v560 = vmax.f32 %v558, %v559
  %v561 = vsel %vm539, %v530, -inf
  %v562 = vrot.slane %v561, 4
  %v563 = vmax.f32 %v561, %v562
  %v564 = vrot.slane %v563, 2
  %v565 = vmax.f32 %v563, %v564
  %v566 = vrot.slane %v565, 1
  %v567 = vmax.f32 %v565, %v566
  %v568 = vsel %vm539, %v531, -inf
  %v569 = vrot.slane %v568, 4
  %v570 = vmax.f32 %v568, %v569
  %v571 = vrot.slane %v570, 2
  %v572 = vmax.f32 %v570, %v571
  %v573 = vrot.slane %v572, 1
  %v574 = vmax.f32 %v572, %v573
  %v575 = vsel %vm539, %v532, -inf
  %v576 = vrot.slane %v575, 4
  %v577 = vmax.f32 %v575, %v576
  %v578 = vrot.slane %v577, 2
  %v579 = vmax.f32 %v577, %v578
  %v580 = vrot.slane %v579, 1
  %v581 = vmax.f32 %v579, %v580
  %v582 = vsel %vm539, %v533, -inf
  %v583 = vrot.slane %v582, 4
  %v584 = vmax.f32 %v582, %v583
  %v585 = vrot.slane %v584, 2
  %v586 = vmax.f32 %v584, %v585
  %v587 = vrot.slane %v586, 1
  %v588 = vmax.f32 %v586, %v587
  %v589 = vsel %vm539, %v534, -inf
  %v590 = vrot.slane %v589, 4
  %v591 = vmax.f32 %v589, %v590
  %v592 = vrot.slane %v591, 2
  %v593 = vmax.f32 %v591, %v592
  %v594 = vrot.slane %v593, 1
  %v595 = vmax.f32 %v593, %v594
  %v596 = vsel %vm539, %v535, -inf
  %v597 = vrot.slane %v596, 4
  %v598 = vmax.f32 %v596, %v597
  %v599 = vrot.slane %v598, 2
  %v600 = vmax.f32 %v598, %v599
  %v601 = vrot.slane %v600, 1
  %v602 = vmax.f32 %v600, %v601
  %v603 = vsel %vm539, %v536, -inf
  %v604 = vrot.slane %v603, 4
  %v605 = vmax.f32 %v603, %v604
  %v606 = vrot.slane %v605, 2
  %v607 = vmax.f32 %v605, %v606
  %v608 = vrot.slane %v607, 1
  %v609 = vmax.f32 %v607, %v608
  %v610 = vsel %vm539, %v537, -inf
  %v611 = vrot.slane %v610, 4
  %v612 = vmax.f32 %v610, %v611
  %v613 = vrot.slane %v612, 2
  %v614 = vmax.f32 %v612, %v613
  %v615 = vrot.slane %v614, 1
  %v616 = vmax.f32 %v614, %v615
  %v617 = vsel %vm539, %v538, -inf
  %v618 = vrot.slane %v617, 4
  %v619 = vmax.f32 %v617, %v618
  %v620 = vrot.slane %v619, 2
  %v621 = vmax.f32 %v619, %v620
  %v622 = vrot.slane %v621, 1
  %v623 = vmax.f32 %v621, %v622
  %v624 = vmul.f32 %v546, %v546
  %v625 = vmul.f32 %v553, %v553
  %v626 = vmul.f32 %v560, %v560
  %v627 = vmul.f32 %v567, %v567
  %v628 = vmul.f32 %v574, %v574
  %v629 = vmul.f32 %v581, %v581
  %v630 = vmul.f32 %v588, %v588
  %v631 = vmul.f32 %v595, %v595
  %v632 = vmul.f32 %v602, %v602
  %v633 = vmul.f32 %v609, %v609
  %v634 = vmul.f32 %v616, %v616
  %v635 = vmul.f32 %v623, %v623
  %vm648 = vcmask 1041409
  %v649 = vsel %vm648, %v625, %v624
  %vm650 = vcmask 1042434
  %v651 = vsel %vm650, %v626, %v649
  %vm652 = vcmask 1043459
  %v653 = vsel %vm652, %v627, %v651
  %v654 = vsel %vm648, %v629, %v628
  %v655 = vsel %vm650, %v630, %v654
  %v656 = vsel %vm652, %v631, %v655
  %v657 = vsel %vm648, %v633, %v632
  %v658 = vsel %vm650, %v634, %v657
  %v659 = vsel %vm652, %v635, %v658
  %vm663 = vcmask 257024
  %v664 = vsel %vm663, %v653, 0.0
  %665 = vadd.xlane.f32.xlu0 %v664
  %v666 = vpop.xlane.xlu0 %665
  %v667 = vsel %vm663, %v656, 0.0
  %668 = vadd.xlane.f32.xlu0 %v667
  %v669 = vpop.xlane.xlu0 %668
  %v670 = vsel %vm663, %v659, 0.0
  %671 = vadd.xlane.f32.xlu0 %v670
  %v672 = vpop.xlane.xlu0 %671
  %v673 = vmax.f32 %v666, 1e-24
  %v674 = vmax.f32 %v669, 1e-24
  %v675 = vmax.f32 %v672, 1e-24
  %v676 = vrsqrt.pop %v673
  %v677 = vrsqrt.pop %v674
  %v678 = vrsqrt.pop %v675
  %v682 = vrot.slane %v676, 1
  %v683 = vrot.slane %v676, 2
  %v684 = vrot.slane %v676, 3
  %v685 = vrot.slane %v677, 1
  %v686 = vrot.slane %v677, 2
  %v687 = vrot.slane %v677, 3
  %v688 = vrot.slane %v678, 1
  %v689 = vrot.slane %v678, 2
  %v690 = vrot.slane %v678, 3
  %v703 = vmul.f32 %v546, %v676
  %v704 = vmul.f32 %v553, %v682
  %v705 = vmul.f32 %v560, %v683
  %v706 = vmul.f32 %v567, %v684
  %v707 = vmul.f32 %v574, %v677
  %v708 = vmul.f32 %v581, %v685
  %v709 = vmul.f32 %v588, %v686
  %v710 = vmul.f32 %v595, %v687
  %v711 = vmul.f32 %v602, %v678
  %v712 = vmul.f32 %v609, %v688
  %v713 = vmul.f32 %v616, %v689
  %v714 = vmul.f32 %v623, %v690
  %v715 = vmul.f32 %v703, %v707
  %v716 = vmul.f32 %v704, %v708
  %v717 = vmul.f32 %v705, %v709
  %v718 = vmul.f32 %v706, %v710
  %v723 = vrot.slane %v716, 7
  %v724 = vsel %vm648, %v723, %v715
  %v725 = vrot.slane %v717, 6
  %v726 = vsel %vm650, %v725, %v724
  %v727 = vrot.slane %v718, 5
  %v728 = vsel %vm652, %v727, %v726
  %v730 = vsel %vm663, %v728, 0.0
  %731 = vadd.xlane.f32.xlu0 %v730
  %v732 = vpop.xlane.xlu0 %731
  %v733 = vsub.f32 1.0, %v732
  %v734 = vmul.f32 %v703, %v711
  %v735 = vmul.f32 %v704, %v712
  %v736 = vmul.f32 %v705, %v713
  %v737 = vmul.f32 %v706, %v714
  %v742 = vrot.slane %v735, 7
  %v743 = vsel %vm648, %v742, %v734
  %v744 = vrot.slane %v736, 6
  %v745 = vsel %vm650, %v744, %v743
  %v746 = vrot.slane %v737, 5
  %v747 = vsel %vm652, %v746, %v745
  %v749 = vsel %vm663, %v747, 0.0
  %750 = vadd.xlane.f32.xlu0 %v749
  %v751 = vpop.xlane.xlu0 %750
  %v752 = vsub.f32 1.0, %v751
  %v753 = vsub.f32 %v733, %v752
  %v754 = vadd.f32 %v753, 0.1
  %vm755 = vcmask 3072
  %756 = vst.msk [vmem:[%s2] sm:$0xf] %vm755, %v754
  // Predicated region
  $region10: #{siamese_forward_triplet.1} parent=0 // pred_check
    _
  $region11: #{siamese_forward_triplet.1} parent=0 // pred_check_branch
    %758 = sbr.rel (0) target = $region13
  $region12: #{siamese_forward_triplet.1} parent=0 // pred_region
    _
  $region13: #{siamese_forward_triplet.1} parent=0 // pred_fallthru
    _
  // Predicated region
  $region14: #{siamese_forward_triplet.1} parent=0 // pred_check
    _
  $region15: #{siamese_forward_triplet.1} parent=0 // pred_check_branch
    %760 = sbr.rel (0) target = $region17
  $region16: #{siamese_forward_triplet.1} parent=0 // pred_region
    _
  $region17: #{siamese_forward_triplet.1} parent=0 // pred_fallthru
    _

</llo_original>
